<compile_context>
chip_gen: v6e
topology: v6e:2x2x1
jax: 0.10.0
libtpu: 0.0.40
codegen_flags: <defaults>
</compile_context>

<pallas_src>
import functools

import jax
import jax.numpy as jnp
from jax import lax
from jax.experimental import pallas as pl
from jax.experimental.pallas import tpu as pltpu


def _round_up(x, m):
    return ((x + m - 1) // m) * m


def _mlm_classifier_kernel(x_ref, w_ref, b_ref, o_ref):
    # x_ref: (tm, E) bf16   w_ref: (tn, E) bf16   b_ref: (1, tn) f32
    # o_ref: (tm, tn) f32
    acc = lax.dot_general(
        x_ref[...],
        w_ref[...],
        dimension_numbers=(((1,), (1,)), ((), ())),   # contract E on both sides
        preferred_element_type=jnp.float32,
    )
    o_ref[...] = (acc + b_ref[...]).astype(o_ref.dtype)


@functools.partial(jax.jit, static_argnames=("row_tile", "class_tile", "mxu_dtype"))
def mlm_classifier(x, weight, bias, *, row_tile=256, class_tile=512,
                   mxu_dtype=jnp.bfloat16):
    """
    x:      (B, S, E)  float32
    weight: (C, E)     float32   (PyTorch nn.Linear layout, NOT transposed)
    bias:   (C,)       float32
    returns (B, S, C)  float32
    """
    B, S, E = x.shape
    C = weight.shape[0]
    M = B * S

    # --- tile sizes -------------------------------------------------------
    # Row tile: multiple of 8 (sublane), capped at the padded row count.
    tm = min(row_tile, _round_up(M, 8))
    # Class tile: multiple of 128 (lane-dense output), capped at padded C.
    tn = min(class_tile, _round_up(C, 128))

    m_pad = _round_up(M, tm)
    c_pad = _round_up(C, tn)
    grid_m = m_pad // tm
    grid_c = c_pad // tn

    # --- prepare operands (pad + cast for the MXU) ------------------------
    x2d = x.reshape(M, E)
    if m_pad != M:
        x2d = jnp.pad(x2d, ((0, m_pad - M), (0, 0)))
    x2d = x2d.astype(mxu_dtype)

    w = weight
    b = bias
    if c_pad != C:
        w = jnp.pad(w, ((0, c_pad - C), (0, 0)))
        b = jnp.pad(b, ((0, c_pad - C),))
    w = w.astype(mxu_dtype)
    b2d = b.reshape(1, c_pad).astype(jnp.float32)

    in_bytes = x2d.dtype.itemsize
    cost = pl.CostEstimate(
        flops=2 * m_pad * E * c_pad,
        transcendentals=0,
        bytes_accessed=(m_pad * E * in_bytes * grid_c          # x (re-read per class tile)
                        + c_pad * E * in_bytes                  # weight (read once)
                        + c_pad * 4                             # bias
                        + m_pad * c_pad * 4),                   # output
    )

    out2d = pl.pallas_call(
        _mlm_classifier_kernel,
        out_shape=jax.ShapeDtypeStruct((m_pad, c_pad), jnp.float32),
        grid_spec=pltpu.PrefetchScalarGridSpec(
            num_scalar_prefetch=0,
            # Class axis OUTER, row axis INNER: the (tn, E) weight tile stays
            # resident while x row tiles stream under it.
            grid=(grid_c, grid_m),
            in_specs=[
                pl.BlockSpec((tm, E), lambda j, i: (i, 0)),   # x rows
                pl.BlockSpec((tn, E), lambda j, i: (j, 0)),   # weight (C,E) block
                pl.BlockSpec((1, tn), lambda j, i: (0, j)),   # bias
            ],
            out_specs=pl.BlockSpec((tm, tn), lambda j, i: (i, j)),
        ),
        compiler_params=pltpu.CompilerParams(
            dimension_semantics=("parallel", "parallel"),
        ),
        cost_estimate=cost,
    )(x2d, w, b2d)

    return out2d[:M, :C].reshape(B, S, C)


if __name__ == "__main__":
    # Small shapes consistent with the module's forward:
    # (batch_size, seq_length, embedding_dim) -> (batch_size, seq_length, num_classes)
    batch, seq, emb_dim, num_classes = 2, 8, 32, 5

    key = jax.random.PRNGKey(0)
    kx, kw, kb = jax.random.split(key, 3)

    x = jax.random.normal(kx, (batch, seq, emb_dim), dtype=jnp.float32)
    # Deterministic nn.Linear-style init (uniform in +/- 1/sqrt(emb_dim))
    bound = 1.0 / (emb_dim ** 0.5)
    weight = jax.random.uniform(kw, (num_classes, emb_dim),
                                minval=-bound, maxval=bound, dtype=jnp.float32)
    bias = jax.random.uniform(kb, (num_classes,),
                              minval=-bound, maxval=bound, dtype=jnp.float32)

    logits = mlm_classifier(x, weight, bias)
    jax.block_until_ready(logits)

    # Reference check against plain JAX f32 (same math as nn.Linear).
    # Tolerance is loosened because the kernel uses bf16 MXU inputs with
    # f32 accumulation.
    ref = jnp.einsum("bse,ce->bsc", x, weight,
                     preferred_element_type=jnp.float32) + bias
    assert logits.shape == (batch, seq, num_classes)
    assert jnp.allclose(logits, ref, atol=2e-2, rtol=2e-2), (
        float(jnp.max(jnp.abs(logits - ref))))

    print("KERNEL_OK")
</pallas_src>

<mosaic_0001>
module attributes {stable_mosaic.version = 11 : i64} {
  func.func @_mlm_classifier_kernel(%arg0: i32, %arg1: i32, %arg2: memref<16x32xbf16, #tpu.memory_space<vmem>>, %arg3: memref<128x32xbf16, #tpu.memory_space<vmem>>, %arg4: memref<1x128xf32, #tpu.memory_space<vmem>>, %arg5: memref<16x128xf32, #tpu.memory_space<vmem>>) attributes {dimension_semantics = [#tpu.dimension_semantics<parallel>, #tpu.dimension_semantics<parallel>], iteration_bounds = array<i64: 1, 1>, scalar_prefetch = 0 : i64, scratch_operands = 0 : i64, tpu.core_type = #tpu.core_type<tc>, window_params = [{transform_indices = @transform_0, window_bounds = array<i64: 16, 32>}, {transform_indices = @transform_1, window_bounds = array<i64: 128, 32>}, {transform_indices = @transform_2, window_bounds = array<i64: 1, 128>}, {transform_indices = @transform_3, window_bounds = array<i64: 16, 128>}]} {
    %c0 = arith.constant 0 : index
    %c0_0 = arith.constant 0 : index
    %0 = vector.load %arg2[%c0, %c0_0] : memref<16x32xbf16, #tpu.memory_space<vmem>>, vector<16x32xbf16>
    %c0_1 = arith.constant 0 : index
    %c0_2 = arith.constant 0 : index
    %1 = vector.load %arg3[%c0_1, %c0_2] : memref<128x32xbf16, #tpu.memory_space<vmem>>, vector<128x32xbf16>
    %cst = arith.constant dense<0.000000e+00> : vector<16x128xf32>
    %2 = tpu.matmul %0, %1, %cst {dimension_numbers = #tpu.dot_dimension_numbers<[1], [1], [0], [0], [0, 0, 1, 0], [], []>} : vector<16x32xbf16>, vector<128x32xbf16>, vector<16x128xf32> -> vector<16x128xf32>
    %c0_3 = arith.constant 0 : index
    %c0_4 = arith.constant 0 : index
    %3 = vector.load %arg4[%c0_3, %c0_4] : memref<1x128xf32, #tpu.memory_space<vmem>>, vector<1x128xf32>
    %4 = vector.broadcast %3 : vector<1x128xf32> to vector<16x128xf32>
    %5 = arith.addf %2, %4 : vector<16x128xf32>
    %c0_5 = arith.constant 0 : index
    %c0_6 = arith.constant 0 : index
    %6 = vector.load %arg5[%c0_5, %c0_6] : memref<16x128xf32, #tpu.memory_space<vmem>>, vector<16x128xf32>
    tpu.vector_store %arg5[%c0_5, %c0_6], %5 {strides = array<i32>} : memref<16x128xf32, #tpu.memory_space<vmem>>, vector<16x128xf32>,
    return
  }
  func.func @transform_0(%arg0: i32, %arg1: i32) -> (i32, i32) {
    %c0_i32 = arith.constant 0 : i32
    %c0_i32_0 = arith.constant 0 : i32
    return %arg1, %c0_i32 : i32, i32
  }
  func.func @transform_1(%arg0: i32, %arg1: i32) -> (i32, i32) {
    %c0_i32 = arith.constant 0 : i32
    %c0_i32_0 = arith.constant 0 : i32
    return %arg0, %c0_i32 : i32, i32
  }
  func.func @transform_2(%arg0: i32, %arg1: i32) -> (i32, i32) {
    %c0_i32 = arith.constant 0 : i32
    %c0_i32_0 = arith.constant 0 : i32
    return %c0_i32, %arg0 : i32, i32
  }
  func.func @transform_3(%arg0: i32, %arg1: i32) -> (i32, i32) {
    %c0_i32 = arith.constant 0 : i32
    return %arg1, %arg0 : i32, i32
  }
}

</mosaic_0001>

<llo_original>
// kernel: mlm_classifier.1
$region0: #{mlm_classifier.1}
  #allocation0 [shape = 'u32[]', space=smem, size = 0x4, offset = 0x4, fixed_abs, tag = 'smem constant byte address 0x4 - core index']
  #allocation1 [shape = 'u32[144,128]{1,0:T(1,128)}', space=vmem, size = 0x12000, scoped, tag = 'internal scratch']
  %s0 = inlined_call_operand.vmem [shape: bf16[16,32], index: 0, kind: input, shape index: {}]
  %s1 = inlined_call_operand.vmem [shape: bf16[128,32], index: 1, kind: input, shape index: {}]
  %s2 = inlined_call_operand.vmem [shape: f32[1,128], index: 2, kind: input, shape index: {}]
  %s3 = inlined_call_operand.vmem [shape: f32[16,128], index: 3, kind: output, shape index: {}]
  %s4 = sld [smem:[#allocation0]]
  $region22: #{mlm_classifier.1} parent=0
    _
  %s6 = ssub.s32 1, %s4
  %s7 = scalar_select 0, %s6, %s4
  // Predicated region
  $region2: #{mlm_classifier.1} parent=0 // pred_check
    _
  $region3: #{mlm_classifier.1} parent=0 // pred_check_branch
    %9 = sbr.rel (0) target = $region5
  $region4: #{mlm_classifier.1} parent=0 // pred_region
    _
  $region5: #{mlm_classifier.1} parent=0 // pred_fallthru
    _
  // Predicated region
  $region6: #{mlm_classifier.1} parent=0 // pred_check
    _
  $region7: #{mlm_classifier.1} parent=0 // pred_check_branch
    %11 = sbr.rel (0) target = $region9
  $region8: #{mlm_classifier.1} parent=0 // pred_region
    _
  $region9: #{mlm_classifier.1} parent=0 // pred_fallthru
    _
  // Predicated region
  $region10: #{mlm_classifier.1} parent=0 // pred_check
    _
  $region11: #{mlm_classifier.1} parent=0 // pred_check_branch
    %13 = sbr.rel (0) target = $region13
  $region12: #{mlm_classifier.1} parent=0 // pred_region
    _
  $region13: #{mlm_classifier.1} parent=0 // pred_fallthru
    _
  %v15 = vld [vmem:[%s0] sm:$0xf]
  %v16 = vld [vmem:[%s0 + $0x4] sm:$0xf]
  %v17 = vld [vmem:[%s1] sm:$0xf]
  %v18 = vld [vmem:[%s1 + $0x4] sm:$0xf]
  %v19 = vld [vmem:[%s1 + $0x8] sm:$0xf]
  %v20 = vld [vmem:[%s1 + $0xc] sm:$0xf]
  %v21 = vld [vmem:[%s1 + $0x10] sm:$0xf]
  %v22 = vld [vmem:[%s1 + $0x14] sm:$0xf]
  %v23 = vld [vmem:[%s1 + $0x18] sm:$0xf]
  %v24 = vld [vmem:[%s1 + $0x1c] sm:$0xf]
  %v25 = vld [vmem:[%s1 + $0x20] sm:$0xf]
  %v26 = vld [vmem:[%s1 + $0x24] sm:$0xf]
  %v27 = vld [vmem:[%s1 + $0x28] sm:$0xf]
  %v28 = vld [vmem:[%s1 + $0x2c] sm:$0xf]
  %v29 = vld [vmem:[%s1 + $0x30] sm:$0xf]
  %v30 = vld [vmem:[%s1 + $0x34] sm:$0xf]
  %v31 = vld [vmem:[%s1 + $0x38] sm:$0xf]
  %v32 = vld [vmem:[%s1 + $0x3c] sm:$0xf]
  %v33 = vld [vmem:[%s2] sm:$0x1]
  %v35 = vlaneseq
  %v36 = vshrl.u32 %v35, 7
  %v37 = vsub.s32 0, %v36
  %v38 = vrot.slane %v33, %v37
  %v42 = vunpack.c.l.b16 %v15
  %v43 = vunpack.c.l.b16 %v16
  %v44 = vpack.c.b16 %v43, %v42
  %v61 = vunpack.c.l.b16 %v17
  %v62 = vunpack.c.l.b16 %v18
  %v63 = vunpack.c.l.b16 %v19
  %v64 = vunpack.c.l.b16 %v20
  %v65 = vunpack.c.l.b16 %v21
  %v66 = vunpack.c.l.b16 %v22
  %v67 = vunpack.c.l.b16 %v23
  %v68 = vunpack.c.l.b16 %v24
  %v69 = vunpack.c.l.b16 %v25
  %v70 = vunpack.c.l.b16 %v26
  %v71 = vunpack.c.l.b16 %v27
  %v72 = vunpack.c.l.b16 %v28
  %v73 = vunpack.c.l.b16 %v29
  %v74 = vunpack.c.l.b16 %v30
  %v75 = vunpack.c.l.b16 %v31
  %v76 = vunpack.c.l.b16 %v32
  %v77 = vpack.c.b16 %v62, %v61
  %v78 = vpack.c.b16 %v64, %v63
  %v79 = vpack.c.b16 %v66, %v65
  %v80 = vpack.c.b16 %v68, %v67
  %v81 = vpack.c.b16 %v70, %v69
  %v82 = vpack.c.b16 %v72, %v71
  %v83 = vpack.c.b16 %v74, %v73
  %v84 = vpack.c.b16 %v76, %v75
  %vm85 = vcmask 261120
  %v87 = vsel %vm85, %v44, 0
  %v90 = vsel %vm85, %v77, 0
  %v93 = vsel %vm85, %v78, 0
  %v96 = vsel %vm85, %v79, 0
  %v99 = vsel %vm85, %v80, 0
  %v102 = vsel %vm85, %v81, 0
  %v105 = vsel %vm85, %v82, 0
  %v108 = vsel %vm85, %v83, 0
  %v111 = vsel %vm85, %v84, 0
  %113 = vmatprep.subr.bf16.mxu0 0
  %114 = vmatpush1.bf16.xpose.msra.mxu0 %v111
  %115 = vmatprep.subr.bf16.mxu0 0
  %116 = vmatpush1.bf16.xpose.msra.mxu0 %v108
  %117 = vmatprep.subr.bf16.mxu0 0
  %118 = vmatpush1.bf16.xpose.msra.mxu0 %v105
  %119 = vmatprep.subr.bf16.mxu0 0
  %120 = vmatpush1.bf16.xpose.msra.mxu0 %v102
  %121 = vmatprep.subr.bf16.mxu0 0
  %122 = vmatpush1.bf16.xpose.msra.mxu0 %v99
  %123 = vmatprep.subr.bf16.mxu0 0
  %124 = vmatpush1.bf16.xpose.msra.mxu0 %v96
  %125 = vmatprep.subr.bf16.mxu0 0
  %126 = vmatpush1.bf16.xpose.msra.mxu0 %v93
  %127 = vmatprep.subr.bf16.mxu0 0
  %128 = vmatpush1.bf16.xpose.msra.mxu0 %v90
  %129 = vmatprep.subr.bf16.mxu0 0
  %130 = vmatpush2.bf16.xpose.msra.mxu0 0
  %131 = vmatprep.subr.bf16.mxu0 0
  %132 = vmatpush2.bf16.xpose.msra.mxu0 0
  %133 = vmatprep.subr.bf16.mxu0 0
  %134 = vmatpush2.bf16.xpose.msra.mxu0 0
  %135 = vmatprep.subr.bf16.mxu0 0
  %136 = vmatpush2.bf16.xpose.msra.mxu0 0
  %137 = vmatprep.subr.bf16.mxu0 0
  %138 = vmatpush2.bf16.xpose.msra.mxu0 0
  %139 = vmatprep.subr.bf16.mxu0 0
  %140 = vmatpush2.bf16.xpose.msra.mxu0 0
  %141 = vmatprep.subr.bf16.mxu0 0
  %142 = vmatpush2.bf16.xpose.msra.mxu0 0
  %143 = vmatprep.subr.bf16.mxu0 0
  %144 = vmatpush2.bf16.xpose.msra.mxu0 0
  %145 = vmatprep.mubr.bf16.mxu0 0
  %146 = vmatmul.mubr.bf16.gmra.mxu0 %v87
  %v147 = vpop.f32.mrf.mxu0
  %v148 = vadd.f32 %v38, %v147
  %v149 = vpop.f32.mrf.mxu0
  %v150 = vpop.f32.mrf.mxu0
  %v151 = vadd.f32 %v38, %v150
  %v152 = vpop.f32.mrf.mxu0
  %153 = vdwg.mxu0
  %154 = vst [vmem:[%s3] sm:$0xff] %v148
  %155 = vst [vmem:[%s3 + $0x8] sm:$0xff] %v151
  // Predicated region
  $region14: #{mlm_classifier.1} parent=0 // pred_check
    _
  $region15: #{mlm_classifier.1} parent=0 // pred_check_branch
    %157 = sbr.rel (0) target = $region17
  $region16: #{mlm_classifier.1} parent=0 // pred_region
    _
  $region17: #{mlm_classifier.1} parent=0 // pred_fallthru
    _
  // Predicated region
  $region18: #{mlm_classifier.1} parent=0 // pred_check
    _
  $region19: #{mlm_classifier.1} parent=0 // pred_check_branch
    %159 = sbr.rel (0) target = $region21
  $region20: #{mlm_classifier.1} parent=0 // pred_region
    _
  $region21: #{mlm_classifier.1} parent=0 // pred_fallthru
    _

</llo_original>
